<compile_context>
chip_gen: v7x
topology: tpu7x:2x2x1
jax: 0.10.0
libtpu: 0.0.40
codegen_flags: <defaults>
</compile_context>

<pallas_src>
import jax
import jax.numpy as jnp
from jax.experimental import pallas as pl
from jax.experimental.pallas import tpu as pltpu

_SUBLANES = 8
_MIN_LANES = 128


def _copy_kernel(x_ref, o_ref):
    # straight VMEM tile copy (identity)
    o_ref[...] = x_ref[...]


def _pick_lanes(total: int) -> int:
    """Widest lane-dense slab (multiple of 128) that doesn't waste much padding."""
    for lanes in (512, 256, 128):
        # require at least a few full (8 x lanes) row-groups so padding is negligible
        if total >= 4 * lanes * _SUBLANES:
            return lanes
    return _MIN_LANES


def _pallas_identity_copy(flat, *, target_tile_bytes=2 * 1024 * 1024):
    """Materialized identity copy of a 1-D array via a lane-dense tiled Pallas kernel."""
    total = flat.shape[0]
    itemsize = jnp.dtype(flat.dtype).itemsize
    lanes = _pick_lanes(total)

    # Pad so the payload reshapes to a (rows, lanes) slab with rows % 8 == 0.
    row_quantum = lanes * _SUBLANES
    total_pad = ((total + row_quantum - 1) // row_quantum) * row_quantum
    if total_pad != total:
        flat = jnp.pad(flat, (0, total_pad - total))
    rows = total_pad // lanes

    # ~2 MiB tiles: big enough to sit near the HBM roofline, small enough that
    # double-buffering in + out (4 buffers) fits every generation's scoped VMEM.
    rows_per_tile = max(
        _SUBLANES,
        (target_tile_bytes // (lanes * itemsize)) // _SUBLANES * _SUBLANES,
    )
    rows_per_tile = min(rows_per_tile, rows)  # rows is a multiple of 8
    grid = (pl.cdiv(rows, rows_per_tile),)    # partial tail tile is masked by Pallas

    x2d = flat.reshape(rows, lanes)

    out2d = pl.pallas_call(
        _copy_kernel,
        out_shape=jax.ShapeDtypeStruct((rows, lanes), flat.dtype),
        grid_spec=pl.GridSpec(
            grid=grid,
            in_specs=[pl.BlockSpec((rows_per_tile, lanes), lambda i: (i, 0))],
            out_specs=pl.BlockSpec((rows_per_tile, lanes), lambda i: (i, 0)),
        ),
        # Identity copy: let XLA reuse the input buffer when it is donatable.
        input_output_aliases={0: 0},
        cost_estimate=pl.CostEstimate(
            flops=0,
            transcendentals=0,
            bytes_accessed=2 * total_pad * itemsize,
        ),
        compiler_params=pltpu.CompilerParams(
            dimension_semantics=("parallel",),
            vmem_limit_bytes=32 * 1024 * 1024,
        ),
    )(x2d)

    out_flat = out2d.reshape(total_pad)
    if total_pad != total:
        out_flat = out_flat[:total]
    return out_flat


def generator_format(x, frames_per_clip: int, size: int, *, materialize: bool = False):
    """Pallas/JAX equivalent of GeneratorFormat.forward(x, size).

    x: array whose leading dim is the batch; total elements per batch item
       must equal 3 * frames_per_clip * size * size.
    Returns array of shape (B, 3, frames_per_clip, size, size), same dtype.

    materialize=False (default): free metadata-only reshape, no kernel launch.
    materialize=True: forces an HBM round-trip through the tiled Pallas copy
                      (benchmarking / layout-materialization path only).
    """
    b = x.shape[0]
    n = 3 * frames_per_clip * size * size
    out_shape = (b, 3, frames_per_clip, size, size)

    if not materialize:
        # The module is a pure view; reshape is metadata-only in XLA.
        return x.reshape(out_shape)

    flat = x.reshape(b * n)
    out_flat = _pallas_identity_copy(flat)
    return out_flat.reshape(out_shape)


if __name__ == "__main__":
    frames_per_clip = 4
    size = 16
    batch = 2

    key = jax.random.PRNGKey(0)
    # input as a flat (B, 3*F*S*S) tensor, as produced upstream of the view
    x = jax.random.normal(
        key, (batch, 3 * frames_per_clip * size * size), dtype=jnp.float32
    )

    ref = x.reshape(batch, 3, frames_per_clip, size, size)

    # Default (production) path: no kernel, just the free reshape.
    fast = jax.block_until_ready(generator_format(x, frames_per_clip, size))

    # Benchmark path: exercise the Pallas copy kernel once.
    copied = jax.jit(
        lambda a: generator_format(a, frames_per_clip, size, materialize=True)
    )(x)
    copied = jax.block_until_ready(copied)

    assert fast.shape == (batch, 3, frames_per_clip, size, size)
    assert copied.shape == (batch, 3, frames_per_clip, size, size)
    assert fast.dtype == x.dtype and copied.dtype == x.dtype
    assert bool(jnp.array_equal(fast, ref))
    assert bool(jnp.array_equal(copied, ref))

    print("KERNEL_OK")
</pallas_src>

<mosaic_0001>
module attributes {stable_mosaic.version = 11 : i64} {
  func.func @_copy_kernel(%arg0: i32, %arg1: memref<48x128xf32, #tpu.memory_space<vmem>>, %arg2: memref<48x128xf32, #tpu.memory_space<vmem>>) attributes {dimension_semantics = [#tpu.dimension_semantics<parallel>], iteration_bounds = array<i64: 1>, scalar_prefetch = 0 : i64, scratch_operands = 0 : i64, tpu.core_type = #tpu.core_type<tc>, window_params = [{transform_indices = @transform_0, window_bounds = array<i64: 48, 128>}, {transform_indices = @transform_1, window_bounds = array<i64: 48, 128>}]} {
    %c0 = arith.constant 0 : index
    %c0_0 = arith.constant 0 : index
    %0 = vector.load %arg1[%c0, %c0_0] : memref<48x128xf32, #tpu.memory_space<vmem>>, vector<48x128xf32>
    %c0_1 = arith.constant 0 : index
    %c0_2 = arith.constant 0 : index
    %1 = vector.load %arg2[%c0_1, %c0_2] : memref<48x128xf32, #tpu.memory_space<vmem>>, vector<48x128xf32>
    tpu.vector_store %arg2[%c0_1, %c0_2], %0 {strides = array<i32>} : memref<48x128xf32, #tpu.memory_space<vmem>>, vector<48x128xf32>,
    return
  }
  func.func @transform_0(%arg0: i32) -> (i32, i32) {
    %c0_i32 = arith.constant 0 : i32
    %c0_i32_0 = arith.constant 0 : i32
    return %arg0, %c0_i32 : i32, i32
  }
  func.func @transform_1(%arg0: i32) -> (i32, i32) {
    %c0_i32 = arith.constant 0 : i32
    %c0_i32_0 = arith.constant 0 : i32
    return %arg0, %c0_i32 : i32, i32
  }
}

</mosaic_0001>

<llo_original>
// kernel: _lambda_.1
$region0: #{_lambda_.1}
  #allocation0 [shape = 'u32[]', space=smem, size = 0x4, offset = 0x4, fixed_abs, tag = 'smem constant byte address 0x4 - core index']
  #allocation1 [shape = 'u32[144,128]{1,0:T(1,128)}', space=vmem, size = 0x12000, scoped, tag = 'internal scratch']
  %s0 = inlined_call_operand.vmem [shape: f32[48,128], index: 0, kind: input, shape index: {}, may-alias: {0,1}]
  %s1 = inlined_call_operand.vmem [shape: f32[48,128], index: 1, kind: output, shape index: {}, may-alias: {0,1}]
  %s2 = sld [smem:[#allocation0]]
  $region14: #{_lambda_.1} parent=0
    _
  %s4 = ssub.s32 1, %s2
  %s5 = scalar_select 0, %s4, %s2
  // Predicated region
  $region2: #{_lambda_.1} parent=0 // pred_check
    _
  $region3: #{_lambda_.1} parent=0 // pred_check_branch
    %7 = sbr.rel (0) target = $region5
  $region4: #{_lambda_.1} parent=0 // pred_region
    _
  $region5: #{_lambda_.1} parent=0 // pred_fallthru
    _
  %v8 = vld [vmem:[%s0] sm:$0xff]
  %v9 = vld [vmem:[%s0 + $0x8] sm:$0xff]
  %v10 = vld [vmem:[%s0 + $0x10] sm:$0xff]
  %v11 = vld [vmem:[%s0 + $0x18] sm:$0xff]
  %v12 = vld [vmem:[%s0 + $0x20] sm:$0xff]
  %v13 = vld [vmem:[%s0 + $0x28] sm:$0xff]
  %14 = vst [vmem:[%s1] sm:$0xff] %v8
  %15 = vst [vmem:[%s1 + $0x8] sm:$0xff] %v9
  %16 = vst [vmem:[%s1 + $0x10] sm:$0xff] %v10
  %17 = vst [vmem:[%s1 + $0x18] sm:$0xff] %v11
  %18 = vst [vmem:[%s1 + $0x20] sm:$0xff] %v12
  %19 = vst [vmem:[%s1 + $0x28] sm:$0xff] %v13
  // Predicated region
  $region6: #{_lambda_.1} parent=0 // pred_check
    _
  $region7: #{_lambda_.1} parent=0 // pred_check_branch
    %21 = sbr.rel (0) target = $region9
  $region8: #{_lambda_.1} parent=0 // pred_region
    _
  $region9: #{_lambda_.1} parent=0 // pred_fallthru
    _
  // Predicated region
  $region10: #{_lambda_.1} parent=0 // pred_check
    _
  $region11: #{_lambda_.1} parent=0 // pred_check_branch
    %23 = sbr.rel (0) target = $region13
  $region12: #{_lambda_.1} parent=0 // pred_region
    _
  $region13: #{_lambda_.1} parent=0 // pred_fallthru
    _

</llo_original>
